<compile_context>
chip_gen: v7x
topology: tpu7x:2x2x1
jax: 0.10.0
libtpu: 0.0.40
codegen_flags: <defaults>
</compile_context>

<pallas_src>
import jax
import jax.numpy as jnp
from jax import lax
from jax.experimental import pallas as pl
from jax.experimental.pallas import tpu as pltpu
from jax.scipy.special import gammaln

EPS = 1e-8
_HALF_LOG_2PI = 0.9189385332046727


def _round_up(x, m):
    return ((x + m - 1) // m) * m


def _lgamma(z):
    """log Gamma(z) for z >= EPS (z = counts + theta, or counts + 1).

    4-step push-up folded into ONE log: z*(z+1)*(z+2)*(z+3) stays inside f32
    range for z up to ~4e9 (safe for count data), then a 4-term Stirling
    series at zs = z + 4 whose 1/zs uses the approximate EUP reciprocal.
    EUP cost: 2 logs + 1 vrcp per call.  Truncation error <= ~3e-9 absolute.
    """
    z = z.astype(jnp.float32)
    shift = jnp.log(z * (z + 1.0) * (z + 2.0) * (z + 3.0))   # 1 EUP log
    zs = z + 4.0
    zinv = pl.reciprocal(zs, approx=True)                    # EUP vrcp (cheap)
    zinv2 = zinv * zinv
    series = zinv * (1.0 / 12.0
                     + zinv2 * (-1.0 / 360.0
                                + zinv2 * (1.0 / 1260.0
                                           + zinv2 * (-1.0 / 1680.0))))
    return (zs - 0.5) * jnp.log(zs) - zs + _HALF_LOG_2PI + series - shift


def _make_nb_kernel(N, G, tile_n, tile_g, mask_rows, mask_cols):
    n_strips = tile_g // 128
    n_row_folds = tile_n // 8

    def kernel(mean_ref, disp_ref, sf_ref, data_ref, out_ref, acc_ref):
        i = pl.program_id(0)
        j = pl.program_id(1)

        @pl.when(j == 0)
        def _init():
            acc_ref[...] = jnp.zeros_like(acc_ref)

        sf = sf_ref[...].astype(jnp.float32)                  # (tile_n, 1)

        row_mask = None
        if mask_rows:
            row_ids = i * tile_n + lax.broadcasted_iota(jnp.int32, (tile_n, 1), 0)
            row_mask = row_ids < N
            sf = jnp.where(row_mask, sf, 1.0)

        # Fused compute + lane-fold, one 128-lane gene strip at a time.
        for c in range(n_strips):
            lo, hi = c * 128, (c + 1) * 128
            mean = mean_ref[:, lo:hi].astype(jnp.float32)     # (tile_n, 128)
            data = data_ref[:, lo:hi].astype(jnp.float32)     # (tile_n, 128)
            theta = disp_ref[:, lo:hi].astype(jnp.float32)    # (1, 128)

            mask = row_mask
            if mask_cols:
                col_ids = (j * tile_g + lo
                           + lax.broadcasted_iota(jnp.int32, (1, 128), 1))
                col_mask = col_ids < G
                theta = jnp.where(col_mask, theta, 1.0)
                mask = col_mask if mask is None else (mask & col_mask)

            if mask is not None:
                # Safe values BEFORE logs/lgamma so ragged-edge garbage can
                # never produce NaN/Inf.
                mean = jnp.where(mask, mean, 0.0)
                data = jnp.where(mask, data, 0.0)

            mu = sf * mean
            log_theta_mu = jnp.log(theta + mu + EPS)          # EUP
            log_mu = jnp.log(mu + EPS)                        # EUP
            # Full log-likelihood minus the hoisted theta-only terms:
            #   data*(log mu - log(theta+mu)) - theta*log(theta+mu)
            #   + lgamma(data+theta+eps) - lgamma(data+1)
            rest = (data * (log_mu - log_theta_mu)
                    - theta * log_theta_mu
                    + _lgamma(data + theta + EPS)
                    - _lgamma(data + 1.0))
            if mask is not None:
                rest = jnp.where(mask, rest, 0.0)
            acc_ref[...] += rest

        @pl.when(j == pl.num_programs(1) - 1)
        def _finalize():
            # Fold (tile_n, 128) -> (8, 128) with sublane-aligned vreg adds;
            # the lane-dense per-row-block partial keeps the cell axis fully
            # "parallel" (v7x megacore) and is summed in the wrapper.
            folded = acc_ref[0:8, :]
            for r in range(1, n_row_folds):
                folded = folded + acc_ref[r * 8:(r + 1) * 8, :]
            out_ref[0] = folded

    return kernel


def negative_binomial_loss(mean, dispersion, size_factors, target_data,
                           *, tile_n=512, tile_g=2048):
    """neg_logL = -sum(log NB(target | mu=size_factors*mean, theta=dispersion))."""
    N, G = mean.shape
    assert dispersion.shape == (1, G)
    assert size_factors.shape == (N, 1)
    assert target_data.shape == (N, G)

    def _as_kernel_dtype(x):
        # f32/bf16 pass through untouched (bf16 halves HBM bytes on v5e);
        # anything else (integer counts, f64) is cast to f32 up front.
        if x.dtype in (jnp.float32, jnp.bfloat16):
            return x
        return x.astype(jnp.float32)

    mean = _as_kernel_dtype(mean)
    dispersion = _as_kernel_dtype(dispersion)
    size_factors = _as_kernel_dtype(size_factors)
    target_data = _as_kernel_dtype(target_data)

    # Tile sizing: big tiles amortize the ~0.35 us/step grid overhead.
    # Sublane tile multiple of 16 (safe for bf16 packing too), lane tile
    # multiple of 128.  (512, 2048) f32 double-buffered is ~16.5 MiB.
    tile_n = min(tile_n, _round_up(N, 16))
    tile_g = min(tile_g, _round_up(G, 128))
    num_i = (N + tile_n - 1) // tile_n
    num_j = (G + tile_g - 1) // tile_g

    # No jnp.pad of the big arrays: ragged edges are masked in-kernel.
    mask_rows = (N % tile_n) != 0
    mask_cols = (G % tile_g) != 0

    kernel = _make_nb_kernel(N, G, tile_n, tile_g, mask_rows, mask_cols)

    cost = pl.CostEstimate(
        flops=40 * N * G,
        transcendentals=8 * N * G,
        bytes_accessed=4 * (2 * N * G + N + G) + 4 * num_i * 8 * 128,
    )

    partials = pl.pallas_call(
        kernel,
        out_shape=jax.ShapeDtypeStruct((num_i, 8, 128), jnp.float32),
        grid_spec=pltpu.PrefetchScalarGridSpec(
            num_scalar_prefetch=0,
            grid=(num_i, num_j),
            in_specs=[
                pl.BlockSpec((tile_n, tile_g), lambda i, j: (i, j)),   # mean
                pl.BlockSpec((1, tile_g), lambda i, j: (0, j)),        # dispersion
                pl.BlockSpec((tile_n, 1), lambda i, j: (i, 0)),        # size_factors
                pl.BlockSpec((tile_n, tile_g), lambda i, j: (i, j)),   # target_data
            ],
            out_specs=pl.BlockSpec((1, 8, 128), lambda i, j: (i, 0, 0)),
            scratch_shapes=[pltpu.VMEM((tile_n, 128), jnp.float32)],
        ),
        compiler_params=pltpu.CompilerParams(
            # Cell axis independent -> shardable across TensorCores (v7x
            # megacore); gene axis carries the accumulator -> arbitrary.
            dimension_semantics=("parallel", "arbitrary"),
            vmem_limit_bytes=28 * 1024 * 1024,
        ),
        cost_estimate=cost,
    )(mean, dispersion, size_factors, target_data)

    # Hoisted theta-only log-likelihood terms (independent of the cell axis):
    # each of the N rows contributes sum_g[theta*log(theta+eps) - lgamma(theta+eps)].
    disp_f32 = dispersion.astype(jnp.float32)
    hoisted = jnp.sum(disp_f32 * jnp.log(disp_f32 + EPS) - gammaln(disp_f32 + EPS))
    return -(jnp.sum(partials) + N * hoisted)


def _reference_loss(mean, dispersion, size_factors, target_data):
    mu = size_factors * mean
    theta = jnp.broadcast_to(dispersion, mu.shape)
    data = target_data
    log_L = (theta * (jnp.log(theta + EPS) - jnp.log(theta + mu + EPS))
             + data * (jnp.log(mu + EPS) - jnp.log(theta + mu + EPS))
             + gammaln(data + theta + EPS)
             - gammaln(theta + EPS)
             - gammaln(data + 1.0))
    return -jnp.sum(log_L)


def _run_case(key, N, G):
    k1, k2, k3, k4 = jax.random.split(key, 4)
    mean = jax.random.uniform(k1, (N, G), jnp.float32, 0.5, 5.0)
    dispersion = jax.random.uniform(k2, (1, G), jnp.float32, 0.5, 2.0)
    size_factors = jax.random.uniform(k3, (N, 1), jnp.float32, 0.8, 1.2)
    target_data = jax.random.poisson(k4, 3.0, (N, G)).astype(jnp.float32)

    loss = negative_binomial_loss(mean, dispersion, size_factors, target_data)
    loss = jax.block_until_ready(loss)

    ref = _reference_loss(mean, dispersion, size_factors, target_data)
    rel_err = abs(float(loss) - float(ref)) / (abs(float(ref)) + 1e-6)
    assert rel_err < 1e-3, (
        f"mismatch (N={N}, G={G}): kernel={float(loss)} ref={float(ref)}")


if __name__ == "__main__":
    key = jax.random.PRNGKey(0)
    k_a, k_b = jax.random.split(key)

    # Aligned shapes (no in-kernel masking path).
    _run_case(k_a, N=16, G=256)
    # Ragged shapes (exercise the pad-free masking path on both axes).
    _run_case(k_b, N=13, G=200)

    print("KERNEL_OK")
</pallas_src>

<mosaic_0001>
module attributes {stable_mosaic.version = 11 : i64} {
  func.func @kernel(%arg0: i32, %arg1: i32, %arg2: memref<16x256xf32, #tpu.memory_space<vmem>>, %arg3: memref<1x256xf32, #tpu.memory_space<vmem>>, %arg4: memref<16x1xf32, #tpu.memory_space<vmem>>, %arg5: memref<16x256xf32, #tpu.memory_space<vmem>>, %arg6: memref<1x8x128xf32, #tpu.memory_space<vmem>>, %arg7: memref<16x128xf32, #tpu.memory_space<vmem>>) attributes {dimension_semantics = [#tpu.dimension_semantics<parallel>, #tpu.dimension_semantics<arbitrary>], iteration_bounds = array<i64: 1, 1>, scalar_prefetch = 0 : i64, scratch_operands = 1 : i64, tpu.core_type = #tpu.core_type<tc>, window_params = [{transform_indices = @transform_0, window_bounds = array<i64: 16, 256>}, {transform_indices = @transform_1, window_bounds = array<i64: 1, 256>}, {transform_indices = @transform_2, window_bounds = array<i64: 16, 1>}, {transform_indices = @transform_3, window_bounds = array<i64: 16, 256>}, {transform_indices = @transform_4, window_bounds = array<i64: 1, 8, 128>}]} {
    %c0_i32 = arith.constant 0 : i32
    %0 = arith.cmpi eq, %arg1, %c0_i32 : i32
    %1 = arith.extui %0 : i1 to i32
    %c0_i32_0 = arith.constant 0 : i32
    %2 = arith.cmpi ne, %1, %c0_i32_0 : i32
    scf.if %2 {
      %cst_70 = arith.constant 0.000000e+00 : f32
      %201 = vector.broadcast %cst_70 : f32 to vector<16x128xf32>
      %c0_71 = arith.constant 0 : index
      %c0_72 = arith.constant 0 : index
      %202 = vector.load %arg7[%c0_71, %c0_72] : memref<16x128xf32, #tpu.memory_space<vmem>>, vector<16x128xf32>
      tpu.vector_store %arg7[%c0_71, %c0_72], %201 {strides = array<i32>} : memref<16x128xf32, #tpu.memory_space<vmem>>, vector<16x128xf32>,
    } else {
    }
    %c0 = arith.constant 0 : index
    %c0_1 = arith.constant 0 : index
    %3 = vector.load %arg4[%c0, %c0_1] : memref<16x1xf32, #tpu.memory_space<vmem>>, vector<16x1xf32>
    %c0_2 = arith.constant 0 : index
    %c0_3 = arith.constant 0 : index
    %4 = vector.load %arg2[%c0_2, %c0_3] : memref<16x256xf32, #tpu.memory_space<vmem>>, vector<16x128xf32>
    %c0_4 = arith.constant 0 : index
    %c0_5 = arith.constant 0 : index
    %5 = vector.load %arg5[%c0_4, %c0_5] : memref<16x256xf32, #tpu.memory_space<vmem>>, vector<16x128xf32>
    %c0_6 = arith.constant 0 : index
    %c0_7 = arith.constant 0 : index
    %6 = vector.load %arg3[%c0_6, %c0_7] : memref<1x256xf32, #tpu.memory_space<vmem>>, vector<1x128xf32>
    %7 = vector.broadcast %3 : vector<16x1xf32> to vector<16x128xf32>
    %8 = arith.mulf %7, %4 : vector<16x128xf32>
    %9 = vector.broadcast %6 : vector<1x128xf32> to vector<16x128xf32>
    %10 = arith.addf %9, %8 : vector<16x128xf32>
    %cst = arith.constant 9.99999993E-9 : f32
    %11 = vector.broadcast %cst : f32 to vector<16x128xf32>
    %12 = arith.addf %10, %11 : vector<16x128xf32>
    %13 = math.log %12 : vector<16x128xf32>
    %cst_8 = arith.constant 9.99999993E-9 : f32
    %14 = vector.broadcast %cst_8 : f32 to vector<16x128xf32>
    %15 = arith.addf %8, %14 : vector<16x128xf32>
    %16 = math.log %15 : vector<16x128xf32>
    %17 = arith.subf %16, %13 : vector<16x128xf32>
    %18 = arith.mulf %5, %17 : vector<16x128xf32>
    %19 = vector.broadcast %6 : vector<1x128xf32> to vector<16x128xf32>
    %20 = arith.mulf %19, %13 : vector<16x128xf32>
    %21 = arith.subf %18, %20 : vector<16x128xf32>
    %22 = vector.broadcast %6 : vector<1x128xf32> to vector<16x128xf32>
    %23 = arith.addf %5, %22 : vector<16x128xf32>
    %cst_9 = arith.constant 9.99999993E-9 : f32
    %24 = vector.broadcast %cst_9 : f32 to vector<16x128xf32>
    %25 = arith.addf %23, %24 : vector<16x128xf32>
    %cst_10 = arith.constant 1.000000e+00 : f32
    %26 = vector.broadcast %cst_10 : f32 to vector<16x128xf32>
    %27 = arith.addf %25, %26 : vector<16x128xf32>
    %28 = arith.mulf %25, %27 : vector<16x128xf32>
    %cst_11 = arith.constant 2.000000e+00 : f32
    %29 = vector.broadcast %cst_11 : f32 to vector<16x128xf32>
    %30 = arith.addf %25, %29 : vector<16x128xf32>
    %31 = arith.mulf %28, %30 : vector<16x128xf32>
    %cst_12 = arith.constant 3.000000e+00 : f32
    %32 = vector.broadcast %cst_12 : f32 to vector<16x128xf32>
    %33 = arith.addf %25, %32 : vector<16x128xf32>
    %34 = arith.mulf %31, %33 : vector<16x128xf32>
    %35 = math.log %34 : vector<16x128xf32>
    %cst_13 = arith.constant 4.000000e+00 : f32
    %36 = vector.broadcast %cst_13 : f32 to vector<16x128xf32>
    %37 = arith.addf %25, %36 : vector<16x128xf32>
    %38 = tpu.reciprocal %37 {approx = true} : vector<16x128xf32> -> vector<16x128xf32>
    %39 = arith.mulf %38, %38 : vector<16x128xf32>
    %cst_14 = arith.constant -5.95238118E-4 : f32
    %40 = vector.broadcast %cst_14 : f32 to vector<16x128xf32>
    %41 = arith.mulf %39, %40 : vector<16x128xf32>
    %cst_15 = arith.constant 7.93650805E-4 : f32
    %42 = vector.broadcast %cst_15 : f32 to vector<16x128xf32>
    %43 = arith.addf %42, %41 : vector<16x128xf32>
    %44 = arith.mulf %39, %43 : vector<16x128xf32>
    %cst_16 = arith.constant -0.00277777785 : f32
    %45 = vector.broadcast %cst_16 : f32 to vector<16x128xf32>
    %46 = arith.addf %45, %44 : vector<16x128xf32>
    %47 = arith.mulf %39, %46 : vector<16x128xf32>
    %cst_17 = arith.constant 0.0833333358 : f32
    %48 = vector.broadcast %cst_17 : f32 to vector<16x128xf32>
    %49 = arith.addf %48, %47 : vector<16x128xf32>
    %50 = arith.mulf %38, %49 : vector<16x128xf32>
    %cst_18 = arith.constant 5.000000e-01 : f32
    %51 = vector.broadcast %cst_18 : f32 to vector<16x128xf32>
    %52 = arith.subf %37, %51 : vector<16x128xf32>
    %53 = math.log %37 : vector<16x128xf32>
    %54 = arith.mulf %52, %53 : vector<16x128xf32>
    %55 = arith.subf %54, %37 : vector<16x128xf32>
    %cst_19 = arith.constant 0.918938517 : f32
    %56 = vector.broadcast %cst_19 : f32 to vector<16x128xf32>
    %57 = arith.addf %55, %56 : vector<16x128xf32>
    %58 = arith.addf %57, %50 : vector<16x128xf32>
    %59 = arith.subf %58, %35 : vector<16x128xf32>
    %60 = arith.addf %21, %59 : vector<16x128xf32>
    %cst_20 = arith.constant 1.000000e+00 : f32
    %61 = vector.broadcast %cst_20 : f32 to vector<16x128xf32>
    %62 = arith.addf %5, %61 : vector<16x128xf32>
    %cst_21 = arith.constant 1.000000e+00 : f32
    %63 = vector.broadcast %cst_21 : f32 to vector<16x128xf32>
    %64 = arith.addf %62, %63 : vector<16x128xf32>
    %65 = arith.mulf %62, %64 : vector<16x128xf32>
    %cst_22 = arith.constant 2.000000e+00 : f32
    %66 = vector.broadcast %cst_22 : f32 to vector<16x128xf32>
    %67 = arith.addf %62, %66 : vector<16x128xf32>
    %68 = arith.mulf %65, %67 : vector<16x128xf32>
    %cst_23 = arith.constant 3.000000e+00 : f32
    %69 = vector.broadcast %cst_23 : f32 to vector<16x128xf32>
    %70 = arith.addf %62, %69 : vector<16x128xf32>
    %71 = arith.mulf %68, %70 : vector<16x128xf32>
    %72 = math.log %71 : vector<16x128xf32>
    %cst_24 = arith.constant 4.000000e+00 : f32
    %73 = vector.broadcast %cst_24 : f32 to vector<16x128xf32>
    %74 = arith.addf %62, %73 : vector<16x128xf32>
    %75 = tpu.reciprocal %74 {approx = true} : vector<16x128xf32> -> vector<16x128xf32>
    %76 = arith.mulf %75, %75 : vector<16x128xf32>
    %cst_25 = arith.constant -5.95238118E-4 : f32
    %77 = vector.broadcast %cst_25 : f32 to vector<16x128xf32>
    %78 = arith.mulf %76, %77 : vector<16x128xf32>
    %cst_26 = arith.constant 7.93650805E-4 : f32
    %79 = vector.broadcast %cst_26 : f32 to vector<16x128xf32>
    %80 = arith.addf %79, %78 : vector<16x128xf32>
    %81 = arith.mulf %76, %80 : vector<16x128xf32>
    %cst_27 = arith.constant -0.00277777785 : f32
    %82 = vector.broadcast %cst_27 : f32 to vector<16x128xf32>
    %83 = arith.addf %82, %81 : vector<16x128xf32>
    %84 = arith.mulf %76, %83 : vector<16x128xf32>
    %cst_28 = arith.constant 0.0833333358 : f32
    %85 = vector.broadcast %cst_28 : f32 to vector<16x128xf32>
    %86 = arith.addf %85, %84 : vector<16x128xf32>
    %87 = arith.mulf %75, %86 : vector<16x128xf32>
    %cst_29 = arith.constant 5.000000e-01 : f32
    %88 = vector.broadcast %cst_29 : f32 to vector<16x128xf32>
    %89 = arith.subf %74, %88 : vector<16x128xf32>
    %90 = math.log %74 : vector<16x128xf32>
    %91 = arith.mulf %89, %90 : vector<16x128xf32>
    %92 = arith.subf %91, %74 : vector<16x128xf32>
    %cst_30 = arith.constant 0.918938517 : f32
    %93 = vector.broadcast %cst_30 : f32 to vector<16x128xf32>
    %94 = arith.addf %92, %93 : vector<16x128xf32>
    %95 = arith.addf %94, %87 : vector<16x128xf32>
    %96 = arith.subf %95, %72 : vector<16x128xf32>
    %97 = arith.subf %60, %96 : vector<16x128xf32>
    %c0_31 = arith.constant 0 : index
    %c0_32 = arith.constant 0 : index
    %98 = vector.load %arg7[%c0_31, %c0_32] : memref<16x128xf32, #tpu.memory_space<vmem>>, vector<16x128xf32>
    %99 = arith.addf %98, %97 : vector<16x128xf32>
    %c0_33 = arith.constant 0 : index
    %c0_34 = arith.constant 0 : index
    %100 = vector.load %arg7[%c0_33, %c0_34] : memref<16x128xf32, #tpu.memory_space<vmem>>, vector<16x128xf32>
    tpu.vector_store %arg7[%c0_33, %c0_34], %99 {strides = array<i32>} : memref<16x128xf32, #tpu.memory_space<vmem>>, vector<16x128xf32>,
    %c0_35 = arith.constant 0 : index
    %c128 = arith.constant 128 : index
    %101 = vector.load %arg2[%c0_35, %c128] : memref<16x256xf32, #tpu.memory_space<vmem>>, vector<16x128xf32>
    %c0_36 = arith.constant 0 : index
    %c128_37 = arith.constant 128 : index
    %102 = vector.load %arg5[%c0_36, %c128_37] : memref<16x256xf32, #tpu.memory_space<vmem>>, vector<16x128xf32>
    %c0_38 = arith.constant 0 : index
    %c128_39 = arith.constant 128 : index
    %103 = vector.load %arg3[%c0_38, %c128_39] : memref<1x256xf32, #tpu.memory_space<vmem>>, vector<1x128xf32>
    %104 = vector.broadcast %3 : vector<16x1xf32> to vector<16x128xf32>
    %105 = arith.mulf %104, %101 : vector<16x128xf32>
    %106 = vector.broadcast %103 : vector<1x128xf32> to vector<16x128xf32>
    %107 = arith.addf %106, %105 : vector<16x128xf32>
    %cst_40 = arith.constant 9.99999993E-9 : f32
    %108 = vector.broadcast %cst_40 : f32 to vector<16x128xf32>
    %109 = arith.addf %107, %108 : vector<16x128xf32>
    %110 = math.log %109 : vector<16x128xf32>
    %cst_41 = arith.constant 9.99999993E-9 : f32
    %111 = vector.broadcast %cst_41 : f32 to vector<16x128xf32>
    %112 = arith.addf %105, %111 : vector<16x128xf32>
    %113 = math.log %112 : vector<16x128xf32>
    %114 = arith.subf %113, %110 : vector<16x128xf32>
    %115 = arith.mulf %102, %114 : vector<16x128xf32>
    %116 = vector.broadcast %103 : vector<1x128xf32> to vector<16x128xf32>
    %117 = arith.mulf %116, %110 : vector<16x128xf32>
    %118 = arith.subf %115, %117 : vector<16x128xf32>
    %119 = vector.broadcast %103 : vector<1x128xf32> to vector<16x128xf32>
    %120 = arith.addf %102, %119 : vector<16x128xf32>
    %cst_42 = arith.constant 9.99999993E-9 : f32
    %121 = vector.broadcast %cst_42 : f32 to vector<16x128xf32>
    %122 = arith.addf %120, %121 : vector<16x128xf32>
    %cst_43 = arith.constant 1.000000e+00 : f32
    %123 = vector.broadcast %cst_43 : f32 to vector<16x128xf32>
    %124 = arith.addf %122, %123 : vector<16x128xf32>
    %125 = arith.mulf %122, %124 : vector<16x128xf32>
    %cst_44 = arith.constant 2.000000e+00 : f32
    %126 = vector.broadcast %cst_44 : f32 to vector<16x128xf32>
    %127 = arith.addf %122, %126 : vector<16x128xf32>
    %128 = arith.mulf %125, %127 : vector<16x128xf32>
    %cst_45 = arith.constant 3.000000e+00 : f32
    %129 = vector.broadcast %cst_45 : f32 to vector<16x128xf32>
    %130 = arith.addf %122, %129 : vector<16x128xf32>
    %131 = arith.mulf %128, %130 : vector<16x128xf32>
    %132 = math.log %131 : vector<16x128xf32>
    %cst_46 = arith.constant 4.000000e+00 : f32
    %133 = vector.broadcast %cst_46 : f32 to vector<16x128xf32>
    %134 = arith.addf %122, %133 : vector<16x128xf32>
    %135 = tpu.reciprocal %134 {approx = true} : vector<16x128xf32> -> vector<16x128xf32>
    %136 = arith.mulf %135, %135 : vector<16x128xf32>
    %cst_47 = arith.constant -5.95238118E-4 : f32
    %137 = vector.broadcast %cst_47 : f32 to vector<16x128xf32>
    %138 = arith.mulf %136, %137 : vector<16x128xf32>
    %cst_48 = arith.constant 7.93650805E-4 : f32
    %139 = vector.broadcast %cst_48 : f32 to vector<16x128xf32>
    %140 = arith.addf %139, %138 : vector<16x128xf32>
    %141 = arith.mulf %136, %140 : vector<16x128xf32>
    %cst_49 = arith.constant -0.00277777785 : f32
    %142 = vector.broadcast %cst_49 : f32 to vector<16x128xf32>
    %143 = arith.addf %142, %141 : vector<16x128xf32>
    %144 = arith.mulf %136, %143 : vector<16x128xf32>
    %cst_50 = arith.constant 0.0833333358 : f32
    %145 = vector.broadcast %cst_50 : f32 to vector<16x128xf32>
    %146 = arith.addf %145, %144 : vector<16x128xf32>
    %147 = arith.mulf %135, %146 : vector<16x128xf32>
    %cst_51 = arith.constant 5.000000e-01 : f32
    %148 = vector.broadcast %cst_51 : f32 to vector<16x128xf32>
    %149 = arith.subf %134, %148 : vector<16x128xf32>
    %150 = math.log %134 : vector<16x128xf32>
    %151 = arith.mulf %149, %150 : vector<16x128xf32>
    %152 = arith.subf %151, %134 : vector<16x128xf32>
    %cst_52 = arith.constant 0.918938517 : f32
    %153 = vector.broadcast %cst_52 : f32 to vector<16x128xf32>
    %154 = arith.addf %152, %153 : vector<16x128xf32>
    %155 = arith.addf %154, %147 : vector<16x128xf32>
    %156 = arith.subf %155, %132 : vector<16x128xf32>
    %157 = arith.addf %118, %156 : vector<16x128xf32>
    %cst_53 = arith.constant 1.000000e+00 : f32
    %158 = vector.broadcast %cst_53 : f32 to vector<16x128xf32>
    %159 = arith.addf %102, %158 : vector<16x128xf32>
    %cst_54 = arith.constant 1.000000e+00 : f32
    %160 = vector.broadcast %cst_54 : f32 to vector<16x128xf32>
    %161 = arith.addf %159, %160 : vector<16x128xf32>
    %162 = arith.mulf %159, %161 : vector<16x128xf32>
    %cst_55 = arith.constant 2.000000e+00 : f32
    %163 = vector.broadcast %cst_55 : f32 to vector<16x128xf32>
    %164 = arith.addf %159, %163 : vector<16x128xf32>
    %165 = arith.mulf %162, %164 : vector<16x128xf32>
    %cst_56 = arith.constant 3.000000e+00 : f32
    %166 = vector.broadcast %cst_56 : f32 to vector<16x128xf32>
    %167 = arith.addf %159, %166 : vector<16x128xf32>
    %168 = arith.mulf %165, %167 : vector<16x128xf32>
    %169 = math.log %168 : vector<16x128xf32>
    %cst_57 = arith.constant 4.000000e+00 : f32
    %170 = vector.broadcast %cst_57 : f32 to vector<16x128xf32>
    %171 = arith.addf %159, %170 : vector<16x128xf32>
    %172 = tpu.reciprocal %171 {approx = true} : vector<16x128xf32> -> vector<16x128xf32>
    %173 = arith.mulf %172, %172 : vector<16x128xf32>
    %cst_58 = arith.constant -5.95238118E-4 : f32
    %174 = vector.broadcast %cst_58 : f32 to vector<16x128xf32>
    %175 = arith.mulf %173, %174 : vector<16x128xf32>
    %cst_59 = arith.constant 7.93650805E-4 : f32
    %176 = vector.broadcast %cst_59 : f32 to vector<16x128xf32>
    %177 = arith.addf %176, %175 : vector<16x128xf32>
    %178 = arith.mulf %173, %177 : vector<16x128xf32>
    %cst_60 = arith.constant -0.00277777785 : f32
    %179 = vector.broadcast %cst_60 : f32 to vector<16x128xf32>
    %180 = arith.addf %179, %178 : vector<16x128xf32>
    %181 = arith.mulf %173, %180 : vector<16x128xf32>
    %cst_61 = arith.constant 0.0833333358 : f32
    %182 = vector.broadcast %cst_61 : f32 to vector<16x128xf32>
    %183 = arith.addf %182, %181 : vector<16x128xf32>
    %184 = arith.mulf %172, %183 : vector<16x128xf32>
    %cst_62 = arith.constant 5.000000e-01 : f32
    %185 = vector.broadcast %cst_62 : f32 to vector<16x128xf32>
    %186 = arith.subf %171, %185 : vector<16x128xf32>
    %187 = math.log %171 : vector<16x128xf32>
    %188 = arith.mulf %186, %187 : vector<16x128xf32>
    %189 = arith.subf %188, %171 : vector<16x128xf32>
    %cst_63 = arith.constant 0.918938517 : f32
    %190 = vector.broadcast %cst_63 : f32 to vector<16x128xf32>
    %191 = arith.addf %189, %190 : vector<16x128xf32>
    %192 = arith.addf %191, %184 : vector<16x128xf32>
    %193 = arith.subf %192, %169 : vector<16x128xf32>
    %194 = arith.subf %157, %193 : vector<16x128xf32>
    %c0_64 = arith.constant 0 : index
    %c0_65 = arith.constant 0 : index
    %195 = vector.load %arg7[%c0_64, %c0_65] : memref<16x128xf32, #tpu.memory_space<vmem>>, vector<16x128xf32>
    %196 = arith.addf %195, %194 : vector<16x128xf32>
    %c0_66 = arith.constant 0 : index
    %c0_67 = arith.constant 0 : index
    %197 = vector.load %arg7[%c0_66, %c0_67] : memref<16x128xf32, #tpu.memory_space<vmem>>, vector<16x128xf32>
    tpu.vector_store %arg7[%c0_66, %c0_67], %196 {strides = array<i32>} : memref<16x128xf32, #tpu.memory_space<vmem>>, vector<16x128xf32>,
    %c0_i32_68 = arith.constant 0 : i32
    %198 = arith.cmpi eq, %arg1, %c0_i32_68 : i32
    %199 = arith.extui %198 : i1 to i32
    %c0_i32_69 = arith.constant 0 : i32
    %200 = arith.cmpi ne, %199, %c0_i32_69 : i32
    scf.if %200 {
      %c0_70 = arith.constant 0 : index
      %c0_71 = arith.constant 0 : index
      %201 = vector.load %arg7[%c0_70, %c0_71] : memref<16x128xf32, #tpu.memory_space<vmem>>, vector<8x128xf32>
      %c8 = arith.constant 8 : index
      %c0_72 = arith.constant 0 : index
      %202 = vector.load %arg7[%c8, %c0_72] : memref<16x128xf32, #tpu.memory_space<vmem>>, vector<8x128xf32>
      %203 = arith.addf %201, %202 : vector<8x128xf32>
      %c0_73 = arith.constant 0 : index
      %c0_74 = arith.constant 0 : index
      %c0_75 = arith.constant 0 : index
      %204 = vector.load %arg6[%c0_73, %c0_74, %c0_75] : memref<1x8x128xf32, #tpu.memory_space<vmem>>, vector<1x8x128xf32>
      %205 = vector.shape_cast %204 : vector<1x8x128xf32> to vector<8x128xf32>
      %206 = vector.shape_cast %203 : vector<8x128xf32> to vector<1x8x128xf32>
      tpu.vector_store %arg6[%c0_73, %c0_74, %c0_75], %206 {strides = array<i32>} : memref<1x8x128xf32, #tpu.memory_space<vmem>>, vector<1x8x128xf32>,
    } else {
    }
    return
  }
  func.func @transform_0(%arg0: i32, %arg1: i32) -> (i32, i32) {
    %c0_i32 = arith.constant 0 : i32
    return %arg0, %arg1 : i32, i32
  }
  func.func @transform_1(%arg0: i32, %arg1: i32) -> (i32, i32) {
    %c0_i32 = arith.constant 0 : i32
    %c0_i32_0 = arith.constant 0 : i32
    return %c0_i32, %arg1 : i32, i32
  }
  func.func @transform_2(%arg0: i32, %arg1: i32) -> (i32, i32) {
    %c0_i32 = arith.constant 0 : i32
    %c0_i32_0 = arith.constant 0 : i32
    return %arg0, %c0_i32 : i32, i32
  }
  func.func @transform_3(%arg0: i32, %arg1: i32) -> (i32, i32) {
    %c0_i32 = arith.constant 0 : i32
    return %arg0, %arg1 : i32, i32
  }
  func.func @transform_4(%arg0: i32, %arg1: i32) -> (i32, i32, i32) {
    %c0_i32 = arith.constant 0 : i32
    %c0_i32_0 = arith.constant 0 : i32
    %c0_i32_1 = arith.constant 0 : i32
    return %arg0, %c0_i32, %c0_i32_0 : i32, i32, i32
  }
}

</mosaic_0001>

<llo_original>
// kernel: tpu_custom_call.1
$region0: #{tpu_custom_call.1}
  #allocation0 [shape = 'u32[]', space=smem, size = 0x4, offset = 0x4, fixed_abs, tag = 'smem constant byte address 0x4 - core index']
  #allocation1 [shape = 'u32[144,128]{1,0:T(1,128)}', space=vmem, size = 0x12000, scoped, tag = 'internal scratch']
  #allocation2 [shape = 'f32[16,128]{1,0:T(8,128)}', space=vmem, size = 0x2000, scoped, tag = 'scratch operand']
  %s0 = inlined_call_operand.hbm [shape: f32[16,256], index: 0, kind: input, shape index: {}]
  %s1 = inlined_call_operand.vmem [shape: f32[1,256], index: 1, kind: input, shape index: {}]
  %s2 = inlined_call_operand.vmem [shape: f32[16,1], index: 2, kind: input, shape index: {}]
  %s3 = inlined_call_operand.hbm [shape: f32[16,256], index: 3, kind: input, shape index: {}]
  %s4 = inlined_call_operand.hbm [shape: f32[1,8,128], index: 4, kind: output, shape index: {}]
  %s5 = sld [smem:[#allocation0]]
  $region42: #{tpu_custom_call.1} parent=0
    _
  %s7 = ssub.s32 1, %s5
  %s8 = scalar_select 0, %s7, %s5
  $region1: #{tpu_custom_call.1} parent=0
    #allocation3 [shape = 'u8[16384]{0}', space=vmem, size = 0x4000, scoped, tag = 'input window, operand 0, single buffered']
    #allocation4 [shape = 's32[1]{0}', space=sflag, size = 0x4, scoped, tag = 'scoped memory for tpu_custom_call.1']
    #allocation5 [shape = 's32[1]{0}', space=sflag, size = 0x4, scoped, tag = 'scoped memory for tpu_custom_call.1']
    #allocation6 [shape = 'u8[16384]{0}', space=vmem, size = 0x4000, scoped, tag = 'input window, operand 3, single buffered']
    #allocation7 [shape = 's32[1]{0}', space=sflag, size = 0x4, scoped, tag = 'scoped memory for tpu_custom_call.1']
    #allocation8 [shape = 'u8[4096]{0}', space=vmem, size = 0x1000, scoped, tag = 'output window, operand 0, single buffered']
    %9 = vsyncpa [#allocation4], 0
    %10 = vsyncpa [#allocation7], 0
    %11 = vsyncpa [#allocation5], 0
    // Predicated region
    $region2: #{tpu_custom_call.1} parent=1 // pred_check
      _
    $region3: #{tpu_custom_call.1} parent=1 // pred_check_branch
      %13 = sbr.rel (0) target = $region5
    $region4: #{tpu_custom_call.1} parent=1 // pred_region
      %s15 = ssub.s32 512, 512
      %16 = vsyncadd [#allocation4], %s15
      %s17 = sshll.u32 [#allocation3], 4
      %s18 = int_to_ptr.vmem [resolvable:$true] %s17
      %23 = dma.hbm_to_vmem [thread:$0]  %s0, 512, %s18, [#allocation4], 256, 256, 16
    $region5: #{tpu_custom_call.1} parent=1 // pred_fallthru
      _
    // Predicated region
    $region6: #{tpu_custom_call.1} parent=1 // pred_check
      _
    $region7: #{tpu_custom_call.1} parent=1 // pred_check_branch
      %25 = sbr.rel (0) target = $region9
    $region8: #{tpu_custom_call.1} parent=1 // pred_region
      _
    $region9: #{tpu_custom_call.1} parent=1 // pred_fallthru
      _
    // Predicated region
    $region10: #{tpu_custom_call.1} parent=1 // pred_check
      _
    $region11: #{tpu_custom_call.1} parent=1 // pred_check_branch
      %27 = sbr.rel (0) target = $region13
    $region12: #{tpu_custom_call.1} parent=1 // pred_region
      _
    $region13: #{tpu_custom_call.1} parent=1 // pred_fallthru
      _
    // Predicated region
    $region14: #{tpu_custom_call.1} parent=1 // pred_check
      _
    $region15: #{tpu_custom_call.1} parent=1 // pred_check_branch
      %29 = sbr.rel (0) target = $region17
    $region16: #{tpu_custom_call.1} parent=1 // pred_region
      %s31 = ssub.s32 512, 512
      %32 = vsyncadd [#allocation7], %s31
      %s33 = sshll.u32 [#allocation6], 4
      %s34 = int_to_ptr.vmem [resolvable:$true] %s33
      %39 = dma.hbm_to_vmem [thread:$0]  %s3, 512, %s34, [#allocation7], 256, 256, 16
    $region17: #{tpu_custom_call.1} parent=1 // pred_fallthru
      _
    // Predicated region
    $region18: #{tpu_custom_call.1} parent=1 // pred_check
      _
    $region19: #{tpu_custom_call.1} parent=1 // pred_check_branch
      %41 = sbr.rel (0) target = $region21
    $region20: #{tpu_custom_call.1} parent=1 // pred_region
      %42 = dma.done [#allocation4], 512
    $region21: #{tpu_custom_call.1} parent=1 // pred_fallthru
      _
    // Predicated region
    $region22: #{tpu_custom_call.1} parent=1 // pred_check
      _
    $region23: #{tpu_custom_call.1} parent=1 // pred_check_branch
      %44 = sbr.rel (0) target = $region25
    $region24: #{tpu_custom_call.1} parent=1 // pred_region
      %45 = dma.done [#allocation7], 512
    $region25: #{tpu_custom_call.1} parent=1 // pred_fallthru
      _
    %p46 = scmp.eq.s32.totalorder 0, 0
    // Predicated region
    $region26: #{tpu_custom_call.1} parent=1 // pred_check
      %p47 = pneg %p46
    $region27: #{tpu_custom_call.1} parent=1 // pred_check_branch
      %49 = sbr.rel (%p47) target = $region29
    $region28: #{tpu_custom_call.1} parent=1 // pred_region
      %50 = vst [vmem:[#allocation2] sm:$0xff] 0.0
      %51 = vst [vmem:[#allocation2 + $0x8] sm:$0xff] 0.0
    $region29: #{tpu_custom_call.1} parent=1 // pred_fallthru
      _
    %v52 = vld [vmem:[%s2] sm:$0xff]
    %v53 = vld [vmem:[%s2 + $0x8] sm:$0xff]
    %v54 = vld [vmem:[#allocation3] sm:$0xff]
    %v55 = vld [vmem:[#allocation3 + $0x10] sm:$0xff]
    %v56 = vld [vmem:[#allocation6] sm:$0xff]
    %v57 = vld [vmem:[#allocation6 + $0x10] sm:$0xff]
    %v58 = vld [vmem:[%s1] sm:$0x1]
    %60 = vset.pattern.permute.xlu0 0
    %61 = vperm.xlu0 %60, %v52
    %v62 = vpop.permute.xlu0 %61
    %65 = vset.pattern.permute.xlu0 0
    %66 = vperm.xlu0 %65, %v53
    %v67 = vpop.permute.xlu0 %66
    %v69 = vmul.f32 %v62, %v54
    %v70 = vmul.f32 %v67, %v55
    %v72 = vlaneseq
    %v73 = vshrl.u32 %v72, 7
    %v74 = vsub.s32 0, %v73
    %v75 = vrot.slane %v58, %v74
    %v77 = vadd.f32 %v75, %v69
    %v78 = vadd.f32 %v75, %v70
    %v79 = vadd.f32 %v77, 1e-08
    %v80 = vadd.f32 %v78, 1e-08
    %v81 = vlog2.pop %v79
    %v82 = vmul.f32 %v81, 0.6931472
    %v83 = vlog2.pop %v80
    %v84 = vmul.f32 %v83, 0.6931472
    %v85 = vadd.f32 %v69, 1e-08
    %v86 = vadd.f32 %v70, 1e-08
    %v87 = vlog2.pop %v85
    %v88 = vmul.f32 %v87, 0.6931472
    %v89 = vlog2.pop %v86
    %v90 = vmul.f32 %v89, 0.6931472
    %v91 = vsub.f32 %v88, %v82
    %v92 = vsub.f32 %v90, %v84
    %v93 = vmul.f32 %v56, %v91
    %v94 = vmul.f32 %v57, %v92
    %v95 = vmul.f32 %v75, %v82
    %v96 = vmul.f32 %v75, %v84
    %v97 = vsub.f32 %v93, %v95
    %v98 = vsub.f32 %v94, %v96
    %v99 = vadd.f32 %v56, %v75
    %v100 = vadd.f32 %v57, %v75
    %v101 = vadd.f32 %v99, 1e-08
    %v102 = vadd.f32 %v100, 1e-08
    %v103 = vadd.f32 %v101, 1.0
    %v104 = vadd.f32 %v102, 1.0
    %v105 = vmul.f32 %v101, %v103
    %v106 = vmul.f32 %v102, %v104
    %v107 = vadd.f32 %v101, 2.0
    %v108 = vadd.f32 %v102, 2.0
    %v109 = vmul.f32 %v105, %v107
    %v110 = vmul.f32 %v106, %v108
    %v111 = vadd.f32 %v101, 3.0
    %v112 = vadd.f32 %v102, 3.0
    %v113 = vmul.f32 %v109, %v111
    %v114 = vmul.f32 %v110, %v112
    %v115 = vlog2.pop %v113
    %v116 = vmul.f32 %v115, 0.6931472
    %v117 = vlog2.pop %v114
    %v118 = vmul.f32 %v117, 0.6931472
    %v119 = vadd.f32 %v101, 4.0
    %v120 = vadd.f32 %v102, 4.0
    %v121 = vrcp.pop %v119
    %v122 = vrcp.pop %v120
    %v123 = vmul.f32 %v121, %v121
    %v124 = vmul.f32 %v122, %v122
    %v125 = vmul.f32 %v123, -0.0005952381
    %v126 = vmul.f32 %v124, -0.0005952381
    %v127 = vadd.f32 %v125, 0.0007936508
    %v128 = vadd.f32 %v126, 0.0007936508
    %v129 = vmul.f32 %v123, %v127
    %v130 = vmul.f32 %v124, %v128
    %v131 = vadd.f32 %v129, -0.0027777778
    %v132 = vadd.f32 %v130, -0.0027777778
    %v133 = vmul.f32 %v123, %v131
    %v134 = vmul.f32 %v124, %v132
    %v135 = vadd.f32 %v133, 0.083333336
    %v136 = vadd.f32 %v134, 0.083333336
    %v137 = vmul.f32 %v121, %v135
    %v138 = vmul.f32 %v122, %v136
    %v139 = vsub.f32 %v119, 0.5
    %v140 = vsub.f32 %v120, 0.5
    %v141 = vlog2.pop %v119
    %v142 = vmul.f32 %v141, 0.6931472
    %v143 = vlog2.pop %v120
    %v144 = vmul.f32 %v143, 0.6931472
    %v145 = vmul.f32 %v139, %v142
    %v146 = vmul.f32 %v140, %v144
    %v147 = vsub.f32 %v145, %v119
    %v148 = vsub.f32 %v146, %v120
    %v149 = vadd.f32 %v147, 0.9189385
    %v150 = vadd.f32 %v148, 0.9189385
    %v151 = vadd.f32 %v149, %v137
    %v152 = vadd.f32 %v150, %v138
    %v153 = vsub.f32 %v151, %v116
    %v154 = vsub.f32 %v152, %v118
    %v155 = vadd.f32 %v97, %v153
    %v156 = vadd.f32 %v98, %v154
    %v157 = vadd.f32 %v56, 1.0
    %v158 = vadd.f32 %v57, 1.0
    %v159 = vadd.f32 %v157, 1.0
    %v160 = vadd.f32 %v158, 1.0
    %v161 = vmul.f32 %v157, %v159
    %v162 = vmul.f32 %v158, %v160
    %v163 = vadd.f32 %v157, 2.0
    %v164 = vadd.f32 %v158, 2.0
    %v165 = vmul.f32 %v161, %v163
    %v166 = vmul.f32 %v162, %v164
    %v167 = vadd.f32 %v157, 3.0
    %v168 = vadd.f32 %v158, 3.0
    %v169 = vmul.f32 %v165, %v167
    %v170 = vmul.f32 %v166, %v168
    %v171 = vlog2.pop %v169
    %v172 = vmul.f32 %v171, 0.6931472
    %v173 = vlog2.pop %v170
    %v174 = vmul.f32 %v173, 0.6931472
    %v175 = vadd.f32 %v157, 4.0
    %v176 = vadd.f32 %v158, 4.0
    %v177 = vrcp.pop %v175
    %v178 = vrcp.pop %v176
    %v179 = vmul.f32 %v177, %v177
    %v180 = vmul.f32 %v178, %v178
    %v181 = vmul.f32 %v179, -0.0005952381
    %v182 = vmul.f32 %v180, -0.0005952381
    %v183 = vadd.f32 %v181, 0.0007936508
    %v184 = vadd.f32 %v182, 0.0007936508
    %v185 = vmul.f32 %v179, %v183
    %v186 = vmul.f32 %v180, %v184
    %v187 = vadd.f32 %v185, -0.0027777778
    %v188 = vadd.f32 %v186, -0.0027777778
    %v189 = vmul.f32 %v179, %v187
    %v190 = vmul.f32 %v180, %v188
    %v191 = vadd.f32 %v189, 0.083333336
    %v192 = vadd.f32 %v190, 0.083333336
    %v193 = vmul.f32 %v177, %v191
    %v194 = vmul.f32 %v178, %v192
    %v195 = vsub.f32 %v175, 0.5
    %v196 = vsub.f32 %v176, 0.5
    %v197 = vlog2.pop %v175
    %v198 = vmul.f32 %v197, 0.6931472
    %v199 = vlog2.pop %v176
    %v200 = vmul.f32 %v199, 0.6931472
    %v201 = vmul.f32 %v195, %v198
    %v202 = vmul.f32 %v196, %v200
    %v203 = vsub.f32 %v201, %v175
    %v204 = vsub.f32 %v202, %v176
    %v205 = vadd.f32 %v203, 0.9189385
    %v206 = vadd.f32 %v204, 0.9189385
    %v207 = vadd.f32 %v205, %v193
    %v208 = vadd.f32 %v206, %v194
    %v209 = vsub.f32 %v207, %v172
    %v210 = vsub.f32 %v208, %v174
    %v211 = vsub.f32 %v155, %v209
    %v212 = vsub.f32 %v156, %v210
    %v213 = vld [vmem:[#allocation2] sm:$0xff]
    %v214 = vld [vmem:[#allocation2 + $0x8] sm:$0xff]
    %v215 = vadd.f32 %v213, %v211
    %v216 = vadd.f32 %v214, %v212
    %217 = vst [vmem:[#allocation2] sm:$0xff] %v215
    %218 = vst [vmem:[#allocation2 + $0x8] sm:$0xff] %v216
    %v219 = vld [vmem:[#allocation3 + $0x8] sm:$0xff]
    %v220 = vld [vmem:[#allocation3 + $0x18] sm:$0xff]
    %v221 = vld [vmem:[#allocation6 + $0x8] sm:$0xff]
    %v222 = vld [vmem:[#allocation6 + $0x18] sm:$0xff]
    %v223 = vld [vmem:[%s1 + $0x1] sm:$0x1]
    %v224 = vmul.f32 %v62, %v219
    %v225 = vmul.f32 %v67, %v220
    %v227 = vlaneseq
    %v228 = vshrl.u32 %v227, 7
    %v229 = vsub.s32 0, %v228
    %v230 = vrot.slane %v223, %v229
    %v232 = vadd.f32 %v230, %v224
    %v233 = vadd.f32 %v230, %v225
    %v234 = vadd.f32 %v232, 1e-08
    %v235 = vadd.f32 %v233, 1e-08
    %v236 = vlog2.pop %v234
    %v237 = vmul.f32 %v236, 0.6931472
    %v238 = vlog2.pop %v235
    %v239 = vmul.f32 %v238, 0.6931472
    %v240 = vadd.f32 %v224, 1e-08
    %v241 = vadd.f32 %v225, 1e-08
    %v242 = vlog2.pop %v240
    %v243 = vmul.f32 %v242, 0.6931472
    %v244 = vlog2.pop %v241
    %v245 = vmul.f32 %v244, 0.6931472
    %v246 = vsub.f32 %v243, %v237
    %v247 = vsub.f32 %v245, %v239
    %v248 = vmul.f32 %v221, %v246
    %v249 = vmul.f32 %v222, %v247
    %v250 = vmul.f32 %v230, %v237
    %v251 = vmul.f32 %v230, %v239
    %v252 = vsub.f32 %v248, %v250
    %v253 = vsub.f32 %v249, %v251
    %v254 = vadd.f32 %v221, %v230
    %v255 = vadd.f32 %v222, %v230
    %v256 = vadd.f32 %v254, 1e-08
    %v257 = vadd.f32 %v255, 1e-08
    %v258 = vadd.f32 %v256, 1.0
    %v259 = vadd.f32 %v257, 1.0
    %v260 = vmul.f32 %v256, %v258
    %v261 = vmul.f32 %v257, %v259
    %v262 = vadd.f32 %v256, 2.0
    %v263 = vadd.f32 %v257, 2.0
    %v264 = vmul.f32 %v260, %v262
    %v265 = vmul.f32 %v261, %v263
    %v266 = vadd.f32 %v256, 3.0
    %v267 = vadd.f32 %v257, 3.0
    %v268 = vmul.f32 %v264, %v266
    %v269 = vmul.f32 %v265, %v267
    %v270 = vlog2.pop %v268
    %v271 = vmul.f32 %v270, 0.6931472
    %v272 = vlog2.pop %v269
    %v273 = vmul.f32 %v272, 0.6931472
    %v274 = vadd.f32 %v256, 4.0
    %v275 = vadd.f32 %v257, 4.0
    %v276 = vrcp.pop %v274
    %v277 = vrcp.pop %v275
    %v278 = vmul.f32 %v276, %v276
    %v279 = vmul.f32 %v277, %v277
    %v280 = vmul.f32 %v278, -0.0005952381
    %v281 = vmul.f32 %v279, -0.0005952381
    %v282 = vadd.f32 %v280, 0.0007936508
    %v283 = vadd.f32 %v281, 0.0007936508
    %v284 = vmul.f32 %v278, %v282
    %v285 = vmul.f32 %v279, %v283
    %v286 = vadd.f32 %v284, -0.0027777778
    %v287 = vadd.f32 %v285, -0.0027777778
    %v288 = vmul.f32 %v278, %v286
    %v289 = vmul.f32 %v279, %v287
    %v290 = vadd.f32 %v288, 0.083333336
    %v291 = vadd.f32 %v289, 0.083333336
    %v292 = vmul.f32 %v276, %v290
    %v293 = vmul.f32 %v277, %v291
    %v294 = vsub.f32 %v274, 0.5
    %v295 = vsub.f32 %v275, 0.5
    %v296 = vlog2.pop %v274
    %v297 = vmul.f32 %v296, 0.6931472
    %v298 = vlog2.pop %v275
    %v299 = vmul.f32 %v298, 0.6931472
    %v300 = vmul.f32 %v294, %v297
    %v301 = vmul.f32 %v295, %v299
    %v302 = vsub.f32 %v300, %v274
    %v303 = vsub.f32 %v301, %v275
    %v304 = vadd.f32 %v302, 0.9189385
    %v305 = vadd.f32 %v303, 0.9189385
    %v306 = vadd.f32 %v304, %v292
    %v307 = vadd.f32 %v305, %v293
    %v308 = vsub.f32 %v306, %v271
    %v309 = vsub.f32 %v307, %v273
    %v310 = vadd.f32 %v252, %v308
    %v311 = vadd.f32 %v253, %v309
    %v312 = vadd.f32 %v221, 1.0
    %v313 = vadd.f32 %v222, 1.0
    %v314 = vadd.f32 %v312, 1.0
    %v315 = vadd.f32 %v313, 1.0
    %v316 = vmul.f32 %v312, %v314
    %v317 = vmul.f32 %v313, %v315
    %v318 = vadd.f32 %v312, 2.0
    %v319 = vadd.f32 %v313, 2.0
    %v320 = vmul.f32 %v316, %v318
    %v321 = vmul.f32 %v317, %v319
    %v322 = vadd.f32 %v312, 3.0
    %v323 = vadd.f32 %v313, 3.0
    %v324 = vmul.f32 %v320, %v322
    %v325 = vmul.f32 %v321, %v323
    %v326 = vlog2.pop %v324
    %v327 = vmul.f32 %v326, 0.6931472
    %v328 = vlog2.pop %v325
    %v329 = vmul.f32 %v328, 0.6931472
    %v330 = vadd.f32 %v312, 4.0
    %v331 = vadd.f32 %v313, 4.0
    %v332 = vrcp.pop %v330
    %v333 = vrcp.pop %v331
    %v334 = vmul.f32 %v332, %v332
    %v335 = vmul.f32 %v333, %v333
    %v336 = vmul.f32 %v334, -0.0005952381
    %v337 = vmul.f32 %v335, -0.0005952381
    %v338 = vadd.f32 %v336, 0.0007936508
    %v339 = vadd.f32 %v337, 0.0007936508
    %v340 = vmul.f32 %v334, %v338
    %v341 = vmul.f32 %v335, %v339
    %v342 = vadd.f32 %v340, -0.0027777778
    %v343 = vadd.f32 %v341, -0.0027777778
    %v344 = vmul.f32 %v334, %v342
    %v345 = vmul.f32 %v335, %v343
    %v346 = vadd.f32 %v344, 0.083333336
    %v347 = vadd.f32 %v345, 0.083333336
    %v348 = vmul.f32 %v332, %v346
    %v349 = vmul.f32 %v333, %v347
    %v350 = vsub.f32 %v330, 0.5
    %v351 = vsub.f32 %v331, 0.5
    %v352 = vlog2.pop %v330
    %v353 = vmul.f32 %v352, 0.6931472
    %v354 = vlog2.pop %v331
    %v355 = vmul.f32 %v354, 0.6931472
    %v356 = vmul.f32 %v350, %v353
    %v357 = vmul.f32 %v351, %v355
    %v358 = vsub.f32 %v356, %v330
    %v359 = vsub.f32 %v357, %v331
    %v360 = vadd.f32 %v358, 0.9189385
    %v361 = vadd.f32 %v359, 0.9189385
    %v362 = vadd.f32 %v360, %v348
    %v363 = vadd.f32 %v361, %v349
    %v364 = vsub.f32 %v362, %v327
    %v365 = vsub.f32 %v363, %v329
    %v366 = vsub.f32 %v310, %v364
    %v367 = vsub.f32 %v311, %v365
    %v368 = vld [vmem:[#allocation2] sm:$0xff]
    %v369 = vld [vmem:[#allocation2 + $0x8] sm:$0xff]
    %v370 = vadd.f32 %v368, %v366
    %v371 = vadd.f32 %v369, %v367
    %372 = vst [vmem:[#allocation2] sm:$0xff] %v370
    %373 = vst [vmem:[#allocation2 + $0x8] sm:$0xff] %v371
    // Predicated region
    $region30: #{tpu_custom_call.1} parent=1 // pred_check
      %p374 = pneg %p46
    $region31: #{tpu_custom_call.1} parent=1 // pred_check_branch
      %376 = sbr.rel (%p374) target = $region33
    $region32: #{tpu_custom_call.1} parent=1 // pred_region
      %v377 = vld [vmem:[#allocation2] sm:$0xff]
      %v378 = vld [vmem:[#allocation2 + $0x8] sm:$0xff]
      %v379 = vadd.f32 %v377, %v378
      %380 = vst [vmem:[#allocation8] sm:$0xff] %v379
    $region33: #{tpu_custom_call.1} parent=1 // pred_fallthru
      _
    // Predicated region
    $region34: #{tpu_custom_call.1} parent=1 // pred_check
      _
    $region35: #{tpu_custom_call.1} parent=1 // pred_check_branch
      %382 = sbr.rel (0) target = $region37
    $region36: #{tpu_custom_call.1} parent=1 // pred_region
      %s384 = ssub.s32 128, 128
      %385 = vsyncadd [#allocation5], %s384
      %s387 = sshll.u32 [#allocation8], 4
      %s388 = int_to_ptr.vmem [resolvable:$true] %s387
      %390 = dma.vmem_to_hbm [thread:$0]  %s388, 128, %s4, [#allocation5]
    $region37: #{tpu_custom_call.1} parent=1 // pred_fallthru
      _
    // Predicated region
    $region38: #{tpu_custom_call.1} parent=1 // pred_check
      _
    $region39: #{tpu_custom_call.1} parent=1 // pred_check_branch
      %392 = sbr.rel (0) target = $region41
    $region40: #{tpu_custom_call.1} parent=1 // pred_region
      %393 = dma.done [#allocation5], 128
    $region41: #{tpu_custom_call.1} parent=1 // pred_fallthru
      _
    %394 = vsyncpa [#allocation4], 1
    %395 = vsyncpa [#allocation7], 1
    %396 = vsyncpa [#allocation5], 1

</llo_original>
